<compile_context>
chip_gen: v5e
topology: v5e:2x2
jax: 0.10.0
libtpu: 0.0.40
codegen_flags: <defaults>
</compile_context>

<pallas_src>
import jax
import jax.numpy as jnp
from jax.experimental import pallas as pl
from jax.experimental.pallas import tpu as pltpu


def _round_up(x: int, m: int) -> int:
    return ((x + m - 1) // m) * m


def _pred_heads_kernel(x_ref, w_ref, b_ref, o_ref):
    """Fused Pre_Predictions heads on one row tile.

    x_ref : (TR, D)  VMEM  flattened (batch*seq, feat_dim) tile
    w_ref : (D, 2)   VMEM  column 0 = emotion head, column 1 = cause head
    b_ref : (1, 2)   VMEM  (b_e, b_c)
    o_ref : (TR, 2)  VMEM  fused logits; split into pred_e / pred_c in wrapper
    """
    y = jnp.dot(x_ref[...], w_ref[...], preferred_element_type=jnp.float32)
    o_ref[...] = y + b_ref[...]  # broadcast row-vector bias add (VPU)


def reccon_pred_heads(doc_sents_h, w_e, b_e, w_c, b_c, *, row_tile=512):
    """Pallas wrapper for Reccon_Model.pred2 (Pre_Predictions) forward.

    doc_sents_h : [B, S, D]  (f32 or bf16; dtype preserved into the kernel)
    w_e, w_c    : [1, D]     (torch nn.Linear weight layout)
    b_e, b_c    : [1]
    returns (pred_e, pred_c) each [B, S] float32
    """
    B, S, D = doc_sents_h.shape
    dtype = doc_sents_h.dtype
    BS = B * S

    # Flatten to 2D outside the kernel (free, contiguous reshape).
    x2d = doc_sents_h.reshape(BS, D)

    # Row tile: multiple of 8, capped at row_tile; pad rows so the grid is exact.
    TR = _round_up(min(int(row_tile), _round_up(BS, 8)), 8)
    BS_pad = _round_up(BS, TR)
    if BS_pad != BS:
        x2d = jnp.pad(x2d, ((0, BS_pad - BS), (0, 0)))

    # Fuse both heads into one (D, 2) weight; keep weights in the input dtype
    # (MXU accumulates in f32 via preferred_element_type).
    w = jnp.concatenate([w_e, w_c], axis=0).T.astype(dtype)          # (D, 2)
    b = jnp.concatenate([b_e, b_c]).reshape(1, 2).astype(jnp.float32)  # (1, 2)

    grid = (BS_pad // TR,)
    itemsize = jnp.dtype(dtype).itemsize

    out = pl.pallas_call(
        _pred_heads_kernel,
        out_shape=jax.ShapeDtypeStruct((BS_pad, 2), jnp.float32),
        grid=grid,
        in_specs=[
            pl.BlockSpec((TR, D), lambda i: (i, 0)),   # streamed row tiles
            pl.BlockSpec((D, 2), lambda i: (0, 0)),    # resident fused weights
            pl.BlockSpec((1, 2), lambda i: (0, 0)),    # resident biases
        ],
        out_specs=pl.BlockSpec((TR, 2), lambda i: (i, 0)),
        compiler_params=pltpu.CompilerParams(
            dimension_semantics=("parallel",),         # shard rows across TCs (v7x)
            vmem_limit_bytes=32 * 1024 * 1024,         # safe on v5e/v6e/v7x
        ),
        cost_estimate=pl.CostEstimate(
            flops=4 * BS_pad * D,                      # two D->1 heads
            bytes_accessed=BS_pad * D * itemsize + 8 * BS_pad + 2 * D * itemsize,
            transcendentals=0,
        ),
    )(x2d, w, b)

    pred_e = out[:BS, 0].reshape(B, S)
    pred_c = out[:BS, 1].reshape(B, S)
    return pred_e, pred_c


def _reference(doc_sents_h, w_e, b_e, w_c, b_c):
    """Pure-JAX reference mirroring the torch Pre_Predictions forward."""
    x = doc_sents_h.astype(jnp.float32)
    we = w_e.astype(jnp.float32)
    wc = w_c.astype(jnp.float32)
    pred_e = jnp.einsum("bsd,od->bso", x, we) + b_e.astype(jnp.float32)
    pred_c = jnp.einsum("bsd,od->bso", x, wc) + b_c.astype(jnp.float32)
    return pred_e[..., 0], pred_c[..., 0]


if __name__ == "__main__":
    key = jax.random.PRNGKey(0)
    k_feat, k_we, k_be, k_wc, k_bc, k_feat2 = jax.random.split(key, 6)

    B, S, D = 2, 8, 32          # batch, utterances per doc, feat_dim
    features = jax.random.normal(k_feat, (B, S, D), dtype=jnp.float32)

    # nn.Linear(feat_dim, 1) parameter shapes / init bounds.
    bound = 1.0 / (D ** 0.5)
    w_e = jax.random.uniform(k_we, (1, D), minval=-bound, maxval=bound)
    b_e = jax.random.uniform(k_be, (1,),   minval=-bound, maxval=bound)
    w_c = jax.random.uniform(k_wc, (1, D), minval=-bound, maxval=bound)
    b_c = jax.random.uniform(k_bc, (1,),   minval=-bound, maxval=bound)

    # ---- check 1: f32, single tile ----
    pred_e, pred_c = reccon_pred_heads(features, w_e, b_e, w_c, b_c)
    pred_e = jax.block_until_ready(pred_e)
    pred_c = jax.block_until_ready(pred_c)
    ref_e, ref_c = _reference(features, w_e, b_e, w_c, b_c)
    assert pred_e.shape == (B, S) and pred_c.shape == (B, S)
    assert jnp.allclose(pred_e, ref_e, atol=1e-4, rtol=1e-4)
    assert jnp.allclose(pred_c, ref_c, atol=1e-4, rtol=1e-4)

    # ---- check 2: bf16 input, multi-tile grid + row padding path ----
    B2, S2 = 4, 30              # BS=120 -> padded to 128 with 32-row tiles, grid=(4,)
    feats2 = jax.random.normal(k_feat2, (B2, S2, D), dtype=jnp.bfloat16)
    pe2, pc2 = reccon_pred_heads(feats2, w_e, b_e, w_c, b_c, row_tile=32)
    pe2 = jax.block_until_ready(pe2)
    pc2 = jax.block_until_ready(pc2)
    ref_e2, ref_c2 = _reference(
        feats2, w_e.astype(jnp.bfloat16), b_e, w_c.astype(jnp.bfloat16), b_c)
    assert pe2.shape == (B2, S2) and pc2.shape == (B2, S2)
    assert jnp.allclose(pe2, ref_e2, atol=2e-2, rtol=2e-2)
    assert jnp.allclose(pc2, ref_c2, atol=2e-2, rtol=2e-2)

    print("KERNEL_OK")
</pallas_src>

<mosaic_0001>
module attributes {stable_mosaic.version = 11 : i64} {
  func.func @_pred_heads_kernel(%arg0: i32, %arg1: memref<16x32xf32, #tpu.memory_space<vmem>>, %arg2: memref<32x2xf32, #tpu.memory_space<vmem>>, %arg3: memref<1x2xf32, #tpu.memory_space<vmem>>, %arg4: memref<16x2xf32, #tpu.memory_space<vmem>>) attributes {dimension_semantics = [#tpu.dimension_semantics<parallel>], iteration_bounds = array<i64: 1>, scalar_prefetch = 0 : i64, scratch_operands = 0 : i64, tpu.core_type = #tpu.core_type<tc>, window_params = [{transform_indices = @transform_0, window_bounds = array<i64: 16, 32>}, {pipeline_mode = #tpu.pipeline_mode<synchronous>, transform_indices = @transform_1, window_bounds = array<i64: 32, 2>}, {pipeline_mode = #tpu.pipeline_mode<synchronous>, transform_indices = @transform_2, window_bounds = array<i64: 1, 2>}, {transform_indices = @transform_3, window_bounds = array<i64: 16, 2>}]} {
    %c0 = arith.constant 0 : index
    %c0_0 = arith.constant 0 : index
    %0 = vector.load %arg1[%c0, %c0_0] : memref<16x32xf32, #tpu.memory_space<vmem>>, vector<16x32xf32>
    %c0_1 = arith.constant 0 : index
    %c0_2 = arith.constant 0 : index
    %1 = vector.load %arg2[%c0_1, %c0_2] : memref<32x2xf32, #tpu.memory_space<vmem>>, vector<32x2xf32>
    %cst = arith.constant dense<0.000000e+00> : vector<16x2xf32>
    %2 = tpu.matmul %0, %1, %cst {dimension_numbers = #tpu.dot_dimension_numbers<[1], [0], [0], [1], [0, 0, 1, 1], [], []>} : vector<16x32xf32>, vector<32x2xf32>, vector<16x2xf32> -> vector<16x2xf32>
    %c0_3 = arith.constant 0 : index
    %c0_4 = arith.constant 0 : index
    %3 = vector.load %arg3[%c0_3, %c0_4] : memref<1x2xf32, #tpu.memory_space<vmem>>, vector<1x2xf32>
    %4 = vector.broadcast %3 : vector<1x2xf32> to vector<16x2xf32>
    %5 = arith.addf %2, %4 : vector<16x2xf32>
    %c0_5 = arith.constant 0 : index
    %c0_6 = arith.constant 0 : index
    %6 = vector.load %arg4[%c0_5, %c0_6] : memref<16x2xf32, #tpu.memory_space<vmem>>, vector<16x2xf32>
    tpu.vector_store %arg4[%c0_5, %c0_6], %5 {strides = array<i32>} : memref<16x2xf32, #tpu.memory_space<vmem>>, vector<16x2xf32>,
    return
  }
  func.func @transform_0(%arg0: i32) -> (i32, i32) {
    %c0_i32 = arith.constant 0 : i32
    %c0_i32_0 = arith.constant 0 : i32
    return %arg0, %c0_i32 : i32, i32
  }
  func.func @transform_1(%arg0: i32) -> (i32, i32) {
    %c0_i32 = arith.constant 0 : i32
    %c0_i32_0 = arith.constant 0 : i32
    %c0_i32_1 = arith.constant 0 : i32
    return %c0_i32, %c0_i32_0 : i32, i32
  }
  func.func @transform_2(%arg0: i32) -> (i32, i32) {
    %c0_i32 = arith.constant 0 : i32
    %c0_i32_0 = arith.constant 0 : i32
    %c0_i32_1 = arith.constant 0 : i32
    return %c0_i32, %c0_i32_0 : i32, i32
  }
  func.func @transform_3(%arg0: i32) -> (i32, i32) {
    %c0_i32 = arith.constant 0 : i32
    %c0_i32_0 = arith.constant 0 : i32
    return %arg0, %c0_i32 : i32, i32
  }
}

</mosaic_0001>

<llo_original>
// kernel: tpu_custom_call.1
$region0: #{tpu_custom_call.1}
  #allocation0 [shape = 'u32[]', space=smem, size = 0x4, offset = 0x4, fixed_abs, tag = 'smem constant byte address 0x4 - core index']
  #allocation1 [shape = 'u32[72,128]{1,0:T(1,128)}', space=vmem, size = 0x9000, scoped, tag = 'internal scratch']
  %s0 = inlined_call_operand.vmem [shape: f32[16,32], index: 0, kind: input, shape index: {}]
  %s1 = inlined_call_operand.vmem [shape: f32[32,2], index: 1, kind: input, shape index: {}]
  %s2 = inlined_call_operand.vmem [shape: f32[1,2], index: 2, kind: input, shape index: {}]
  %s3 = inlined_call_operand.vmem [shape: f32[16,2], index: 3, kind: output, shape index: {}]
  %s4 = sld [smem:[#allocation0]]
  $region22: #{tpu_custom_call.1} parent=0
    _
  %s6 = ssub.s32 1, %s4
  %s7 = scalar_select 0, %s6, %s4
  // Predicated region
  $region2: #{tpu_custom_call.1} parent=0 // pred_check
    _
  $region3: #{tpu_custom_call.1} parent=0 // pred_check_branch
    %9 = sbr.rel (0) target = $region5
  $region4: #{tpu_custom_call.1} parent=0 // pred_region
    _
  $region5: #{tpu_custom_call.1} parent=0 // pred_fallthru
    _
  // Predicated region
  $region6: #{tpu_custom_call.1} parent=0 // pred_check
    _
  $region7: #{tpu_custom_call.1} parent=0 // pred_check_branch
    %11 = sbr.rel (0) target = $region9
  $region8: #{tpu_custom_call.1} parent=0 // pred_region
    _
  $region9: #{tpu_custom_call.1} parent=0 // pred_fallthru
    _
  // Predicated region
  $region10: #{tpu_custom_call.1} parent=0 // pred_check
    _
  $region11: #{tpu_custom_call.1} parent=0 // pred_check_branch
    %13 = sbr.rel (0) target = $region13
  $region12: #{tpu_custom_call.1} parent=0 // pred_region
    _
  $region13: #{tpu_custom_call.1} parent=0 // pred_fallthru
    _
  %v14 = vld [vmem:[%s0] sm:$0xff]
  %v15 = vld [vmem:[%s0 + $0x8] sm:$0xff]
  %v16 = vld [vmem:[%s1] sm:$0xff]
  %v17 = vld [vmem:[%s1 + $0x8] sm:$0xff]
  %v18 = vld [vmem:[%s1 + $0x10] sm:$0xff]
  %v19 = vld [vmem:[%s1 + $0x18] sm:$0xff]
  %v20 = vld [vmem:[%s2] sm:$0x1]
  %v22 = vperm.slane %v20, 0
  %vm24 = vcmask 261120
  %v26 = vsel %vm24, %v14, 0
  %v29 = vsel %vm24, %v15, 0
  %31 = vmatpush.msra.mxu0 0.0
  %32 = vmatpush.msra.mxu0 0.0
  %33 = vmatpush.msra.mxu0 0.0
  %34 = vmatpush.msra.mxu0 0.0
  %35 = vmatpush.msra.mxu0 0.0
  %36 = vmatpush.msra.mxu0 0.0
  %37 = vmatpush.msra.mxu0 0.0
  %38 = vmatpush.msra.mxu0 0.0
  %39 = vmatpush.msra.mxu0 0.0
  %40 = vmatpush.msra.mxu0 0.0
  %41 = vmatpush.msra.mxu0 0.0
  %42 = vmatpush.msra.mxu0 0.0
  %43 = vmatpush.msra.mxu0 %v19
  %44 = vmatpush.msra.mxu0 %v18
  %45 = vmatpush.msra.mxu0 %v17
  %46 = vmatpush.msra.mxu0 %v16
  %47 = vmatmul.f32.gmra.mxu0 %v26
  %v48 = vpop.f32.mrf.mxu0
  %v49 = vadd.f32 %v22, %v48
  %50 = vmatmul.f32.gmra.mxu0 %v29
  %v51 = vpop.f32.mrf.mxu0
  %v52 = vadd.f32 %v22, %v51
  %53 = vdwg.mxu0
  %vm54 = vcmask 15360
  %55 = vst.msk [vmem:[%s3] sm:$0xff] %vm54, %v49
  %56 = vst.msk [vmem:[%s3 + $0x8] sm:$0xff] %vm54, %v52
  // Predicated region
  $region14: #{tpu_custom_call.1} parent=0 // pred_check
    _
  $region15: #{tpu_custom_call.1} parent=0 // pred_check_branch
    %58 = sbr.rel (0) target = $region17
  $region16: #{tpu_custom_call.1} parent=0 // pred_region
    _
  $region17: #{tpu_custom_call.1} parent=0 // pred_fallthru
    _
  // Predicated region
  $region18: #{tpu_custom_call.1} parent=0 // pred_check
    _
  $region19: #{tpu_custom_call.1} parent=0 // pred_check_branch
    %60 = sbr.rel (0) target = $region21
  $region20: #{tpu_custom_call.1} parent=0 // pred_region
    _
  $region21: #{tpu_custom_call.1} parent=0 // pred_fallthru
    _

</llo_original>
